<compile_context>
chip_gen: v6e
topology: v6e:2x2x1
jax: 0.10.0
libtpu: 0.0.40
codegen_flags: <defaults>
</compile_context>

<pallas_src>
import functools

import jax
import jax.numpy as jnp
from jax.experimental import pallas as pl
from jax.experimental.pallas import tpu as pltpu

_LANES = 128
_NEG_BIG = -1e30  # finite "minus infinity" baked into padded output-bias lanes


def _pad_to(n, m):
    return ((n + m - 1) // m) * m


def _mlp_kernel(*refs, n_hidden_layers, compute_dtype):
    """refs: x_ref, (w_0, b_0), ..., (w_out, b_out), out_ref.

    Weights are (in, out), lane-padded on the output dim (and on the input dim
    for all layers but the first); biases are (1, out_p) f32.  Padded hidden
    lanes stay exactly zero through ReLU; padded output lanes carry a baked-in
    -1e30 bias so no explicit masking is needed before log_softmax.
    """
    x_ref = refs[0]
    out_ref = refs[-1]
    p = refs[1:-1]

    h = x_ref[...]
    for i in range(n_hidden_layers):
        w = p[2 * i][...]
        b = p[2 * i + 1][...]                                   # f32 bias
        acc = jnp.dot(h, w, preferred_element_type=jnp.float32) + b
        h = jnp.maximum(acc, 0.0).astype(compute_dtype)         # ReLU in f32
        # TODO(synk): training-mode dropout (PRNG mask + 1/(1-p) scale) not
        # implemented; eval-mode dropout is the identity, which this computes.

    z = jnp.dot(h, p[-2][...], preferred_element_type=jnp.float32) + p[-1][...]

    # Numerically stable log_softmax along dim=1 (f32).  Padded lanes sit at
    # ~-1e30, so exp(z - m) underflows to exactly 0 there (no inf/NaN math).
    m = jnp.max(z, axis=1, keepdims=True)
    lse = jnp.log(jnp.sum(jnp.exp(z - m), axis=1, keepdims=True)) + m
    out_ref[...] = (z - lse).astype(out_ref.dtype)


def prepare_params(params, *, compute_dtype=jnp.float32):
    """Pad / cast parameters once (amortized across forward calls).

    params: list of (w, b) with w shaped (in, out), b shaped (out,).
      * output dims padded to 128 lanes (zeros); first-layer input dim is left
        unpadded because x is not padded in HBM.
      * biases are f32; the output bias's padded lanes are set to -1e30 so the
        kernel needs no padded-lane masking before log_softmax.
    """
    n = len(params)
    flat = []
    for li, (w, b) in enumerate(params):
        fi, fo = w.shape
        fi_p = fi if li == 0 else _pad_to(fi, _LANES)
        fo_p = _pad_to(fo, _LANES)
        w_p = jnp.zeros((fi_p, fo_p), compute_dtype).at[:fi, :fo].set(
            w.astype(compute_dtype))
        fill = _NEG_BIG if li == n - 1 else 0.0
        b_p = jnp.full((1, fo_p), fill, jnp.float32).at[:, :fo].set(
            b.astype(jnp.float32))
        flat += [w_p, b_p]
    return tuple(flat)


@functools.partial(
    jax.jit,
    static_argnames=("out_units", "compute_dtype", "out_dtype", "batch_tile",
                     "single_buffer_params"))
def _forward_impl(x, flat_params, *, out_units, compute_dtype, out_dtype,
                  batch_tile, single_buffer_params):
    n_layers = len(flat_params) // 2
    n_hidden_layers = n_layers - 1
    B, in_units = x.shape
    out_p = flat_params[-1].shape[1]
    itemsize = jnp.dtype(compute_dtype).itemsize
    out_itemsize = jnp.dtype(out_dtype).itemsize

    # Batch tile: as large as possible (up to `batch_tile`), but keep the grid
    # length >= 2 when B allows so the "parallel" axis shards across both v7x
    # TensorCores.  Tile rows are a multiple of 8 (or equal to B).
    tb = min(B, batch_tile, _pad_to(pl.cdiv(B, 2), 8))
    grid = (pl.cdiv(B, tb),)

    x_c = x.astype(compute_dtype)   # no lane padding of x in HBM

    in_specs = [pl.BlockSpec((tb, in_units), lambda i: (i, 0))]
    if single_buffer_params:
        # Grid-invariant parameters (index_map == (0, 0)): single-buffer them
        # so their VMEM footprint is not doubled.
        def param_spec(shape):
            return pl.BlockSpec(shape, lambda i: (0, 0),
                                pipeline_mode=pl.Buffered(1))
    else:
        def param_spec(shape):
            return pl.BlockSpec(shape, lambda i: (0, 0))
    in_specs += [param_spec(p.shape) for p in flat_params]
    out_spec = pl.BlockSpec((tb, out_p), lambda i: (i, 0))

    # Advisory cost estimate (padded dims; advisory only).
    weight_elems = sum(int(p.size) for p in flat_params[0::2])
    param_bytes = sum(int(p.size) * p.dtype.itemsize for p in flat_params)
    cost = pl.CostEstimate(
        flops=2 * B * weight_elems,
        transcendentals=B * out_p,                       # exp in log_softmax
        bytes_accessed=(param_bytes + B * in_units * itemsize
                        + B * out_p * out_itemsize),
    )

    # VMEM budget: resident params (x1 if single-buffered) + double-buffered
    # activation I/O tiles + generous per-layer activation headroom + 4 MiB
    # slack.  No artificial floor; clamp to v7x's 64 MiB physical VMEM.
    widest = max(int(p.shape[-1]) for p in flat_params)
    param_bufs = 1 if single_buffer_params else 2
    vmem_est = (param_bufs * param_bytes
                + 2 * tb * in_units * itemsize
                + 2 * tb * out_p * out_itemsize
                + 8 * tb * widest * 4
                + (4 << 20))
    vmem_limit = int(min(64 << 20, vmem_est))

    kernel = functools.partial(
        _mlp_kernel,
        n_hidden_layers=n_hidden_layers,
        compute_dtype=compute_dtype,
    )

    out_padded = pl.pallas_call(
        kernel,
        out_shape=jax.ShapeDtypeStruct((B, out_p), out_dtype),
        grid=grid,
        in_specs=in_specs,
        out_specs=out_spec,
        compiler_params=pltpu.CompilerParams(
            dimension_semantics=("parallel",),   # batch tiles are independent
            vmem_limit_bytes=vmem_limit,
        ),
        cost_estimate=cost,
    )(x_c, *flat_params)

    return out_padded[:, :out_units]


_BUFFERED_1_OK = None   # lazily probed: does this build accept pl.Buffered(1)?


def network_forward(x, flat_params, *, out_units, compute_dtype=jnp.float32,
                    out_dtype=None, batch_tile=1024):
    """Forward pass. `flat_params` must come from prepare_params(...)."""
    global _BUFFERED_1_OK
    if out_dtype is None:
        out_dtype = compute_dtype
    kwargs = dict(out_units=out_units, compute_dtype=compute_dtype,
                  out_dtype=out_dtype, batch_tile=batch_tile)
    if _BUFFERED_1_OK is None:
        try:
            out = _forward_impl(x, flat_params, single_buffer_params=True,
                                **kwargs)
            _BUFFERED_1_OK = True
            return out
        except Exception:
            _BUFFERED_1_OK = False   # fall back to default double-buffering
    if _BUFFERED_1_OK:
        return _forward_impl(x, flat_params, single_buffer_params=True, **kwargs)
    return _forward_impl(x, flat_params, single_buffer_params=False, **kwargs)


def init_params(key, input_units, hidden_units, output_units):
    """Deterministic init mirroring nn.Linear shapes; weights stored (in, out)."""
    sizes = [input_units] + list(hidden_units) + [output_units]
    params = []
    for i in range(len(sizes) - 1):
        fan_in, fan_out = sizes[i], sizes[i + 1]
        key, kw, kb = jax.random.split(key, 3)
        bound = 1.0 / jnp.sqrt(fan_in)
        w = jax.random.uniform(kw, (fan_in, fan_out), jnp.float32, -bound, bound)
        b = jax.random.uniform(kb, (fan_out,), jnp.float32, -bound, bound)
        params.append((w, b))
    return params


def reference_forward(x, params):
    """Pure-JAX reference of the PyTorch module in eval mode."""
    h = x
    for w, b in params[:-1]:
        h = jnp.maximum(h @ w + b, 0.0)
    w, b = params[-1]
    z = h @ w + b
    return jax.nn.log_softmax(z, axis=1)


if __name__ == "__main__":
    key = jax.random.PRNGKey(0)

    input_units = 32
    hidden_units = [64, 32]
    output_units = 10
    drop_p = 0.5  # unused at inference (dropout is identity in eval mode)

    params = init_params(key, input_units, hidden_units, output_units)

    # Pad / cast parameters ONCE per dtype (amortized across calls).
    params_f32 = prepare_params(params, compute_dtype=jnp.float32)
    params_bf16 = prepare_params(params, compute_dtype=jnp.bfloat16)

    # 1) Small batch (single grid step), strict f32 check.
    key, kx = jax.random.split(key)
    x_small = jax.random.normal(kx, (8, input_units), dtype=jnp.float32)
    out_small = jax.block_until_ready(
        network_forward(x_small, params_f32, out_units=output_units))
    ref_small = reference_forward(x_small, params)
    assert out_small.shape == (8, output_units)
    assert jnp.allclose(out_small, ref_small, atol=1e-5, rtol=1e-5), \
        "small-batch mismatch vs reference"

    # 2) Larger batch: 512 rows -> tb=256, grid=(2,) (keeps both v7x TCs busy).
    key, kx2 = jax.random.split(key)
    x_big = jax.random.normal(kx2, (512, input_units), dtype=jnp.float32)
    out_big = jax.block_until_ready(
        network_forward(x_big, params_f32, out_units=output_units))
    ref_big = reference_forward(x_big, params)
    assert out_big.shape == (512, output_units)
    assert jnp.allclose(out_big, ref_big, atol=1e-4, rtol=1e-5), \
        "large-batch mismatch vs reference"

    # 3) Ragged batch (B not a multiple of the tile) is still correct.
    key, kx3 = jax.random.split(key)
    x_rag = jax.random.normal(kx3, (100, input_units), dtype=jnp.float32)
    out_rag = jax.block_until_ready(
        network_forward(x_rag, params_f32, out_units=output_units))
    ref_rag = reference_forward(x_rag, params)
    assert out_rag.shape == (100, output_units)
    assert jnp.allclose(out_rag, ref_rag, atol=1e-4, rtol=1e-5), \
        "ragged-batch mismatch vs reference"

    # 4) bf16 traffic path (v6e/v7x default): 2048 rows -> tb=1024, grid=(2,).
    key, kx4 = jax.random.split(key)
    x_bf = jax.random.normal(kx4, (2048, input_units), dtype=jnp.float32)
    out_bf = jax.block_until_ready(
        network_forward(x_bf, params_bf16, out_units=output_units,
                        compute_dtype=jnp.bfloat16, out_dtype=jnp.bfloat16))
    ref_bf = reference_forward(x_bf, params)
    assert out_bf.shape == (2048, output_units)
    assert jnp.allclose(out_bf.astype(jnp.float32), ref_bf,
                        atol=2e-1, rtol=5e-2), "bf16 mismatch vs reference"

    print("KERNEL_OK")
</pallas_src>

<mosaic_0001>
module attributes {stable_mosaic.version = 11 : i64} {
  func.func @_mlp_kernel(%arg0: i32, %arg1: memref<8x32xf32, #tpu.memory_space<vmem>>, %arg2: memref<32x128xf32, #tpu.memory_space<vmem>>, %arg3: memref<1x128xf32, #tpu.memory_space<vmem>>, %arg4: memref<128x128xf32, #tpu.memory_space<vmem>>, %arg5: memref<1x128xf32, #tpu.memory_space<vmem>>, %arg6: memref<128x128xf32, #tpu.memory_space<vmem>>, %arg7: memref<1x128xf32, #tpu.memory_space<vmem>>, %arg8: memref<8x128xf32, #tpu.memory_space<vmem>>) attributes {dimension_semantics = [#tpu.dimension_semantics<parallel>], iteration_bounds = array<i64: 1>, scalar_prefetch = 0 : i64, scratch_operands = 0 : i64, tpu.core_type = #tpu.core_type<tc>, window_params = [{transform_indices = @transform_0, window_bounds = array<i64: 8, 32>}, {pipeline_mode = #tpu.pipeline_mode<synchronous>, transform_indices = @transform_1, window_bounds = array<i64: 32, 128>}, {pipeline_mode = #tpu.pipeline_mode<synchronous>, transform_indices = @transform_2, window_bounds = array<i64: 1, 128>}, {pipeline_mode = #tpu.pipeline_mode<synchronous>, transform_indices = @transform_3, window_bounds = array<i64: 128, 128>}, {pipeline_mode = #tpu.pipeline_mode<synchronous>, transform_indices = @transform_4, window_bounds = array<i64: 1, 128>}, {pipeline_mode = #tpu.pipeline_mode<synchronous>, transform_indices = @transform_5, window_bounds = array<i64: 128, 128>}, {pipeline_mode = #tpu.pipeline_mode<synchronous>, transform_indices = @transform_6, window_bounds = array<i64: 1, 128>}, {transform_indices = @transform_7, window_bounds = array<i64: 8, 128>}]} {
    %c0 = arith.constant 0 : index
    %c0_0 = arith.constant 0 : index
    %0 = vector.load %arg1[%c0, %c0_0] : memref<8x32xf32, #tpu.memory_space<vmem>>, vector<8x32xf32>
    %c0_1 = arith.constant 0 : index
    %c0_2 = arith.constant 0 : index
    %1 = vector.load %arg2[%c0_1, %c0_2] : memref<32x128xf32, #tpu.memory_space<vmem>>, vector<32x128xf32>
    %c0_3 = arith.constant 0 : index
    %c0_4 = arith.constant 0 : index
    %2 = vector.load %arg3[%c0_3, %c0_4] : memref<1x128xf32, #tpu.memory_space<vmem>>, vector<1x128xf32>
    %cst = arith.constant dense<0.000000e+00> : vector<8x128xf32>
    %3 = tpu.matmul %0, %1, %cst {dimension_numbers = #tpu.dot_dimension_numbers<[1], [0], [0], [1], [0, 0, 1, 1], [], []>} : vector<8x32xf32>, vector<32x128xf32>, vector<8x128xf32> -> vector<8x128xf32>
    %4 = vector.broadcast %2 : vector<1x128xf32> to vector<8x128xf32>
    %5 = arith.addf %3, %4 : vector<8x128xf32>
    %cst_5 = arith.constant 0.000000e+00 : f32
    %6 = vector.broadcast %cst_5 : f32 to vector<8x128xf32>
    %7 = arith.maximumf %5, %6 : vector<8x128xf32>
    %c0_6 = arith.constant 0 : index
    %c0_7 = arith.constant 0 : index
    %8 = vector.load %arg4[%c0_6, %c0_7] : memref<128x128xf32, #tpu.memory_space<vmem>>, vector<128x128xf32>
    %c0_8 = arith.constant 0 : index
    %c0_9 = arith.constant 0 : index
    %9 = vector.load %arg5[%c0_8, %c0_9] : memref<1x128xf32, #tpu.memory_space<vmem>>, vector<1x128xf32>
    %cst_10 = arith.constant dense<0.000000e+00> : vector<8x128xf32>
    %10 = tpu.matmul %7, %8, %cst_10 {dimension_numbers = #tpu.dot_dimension_numbers<[1], [0], [0], [1], [0, 0, 1, 1], [], []>} : vector<8x128xf32>, vector<128x128xf32>, vector<8x128xf32> -> vector<8x128xf32>
    %11 = vector.broadcast %9 : vector<1x128xf32> to vector<8x128xf32>
    %12 = arith.addf %10, %11 : vector<8x128xf32>
    %cst_11 = arith.constant 0.000000e+00 : f32
    %13 = vector.broadcast %cst_11 : f32 to vector<8x128xf32>
    %14 = arith.maximumf %12, %13 : vector<8x128xf32>
    %c0_12 = arith.constant 0 : index
    %c0_13 = arith.constant 0 : index
    %15 = vector.load %arg6[%c0_12, %c0_13] : memref<128x128xf32, #tpu.memory_space<vmem>>, vector<128x128xf32>
    %cst_14 = arith.constant dense<0.000000e+00> : vector<8x128xf32>
    %16 = tpu.matmul %14, %15, %cst_14 {dimension_numbers = #tpu.dot_dimension_numbers<[1], [0], [0], [1], [0, 0, 1, 1], [], []>} : vector<8x128xf32>, vector<128x128xf32>, vector<8x128xf32> -> vector<8x128xf32>
    %c0_15 = arith.constant 0 : index
    %c0_16 = arith.constant 0 : index
    %17 = vector.load %arg7[%c0_15, %c0_16] : memref<1x128xf32, #tpu.memory_space<vmem>>, vector<1x128xf32>
    %18 = vector.broadcast %17 : vector<1x128xf32> to vector<8x128xf32>
    %19 = arith.addf %16, %18 : vector<8x128xf32>
    %cst_17 = arith.constant dense<0xFF800000> : vector<8xf32>
    %20 = vector.multi_reduction <maximumf>, %19, %cst_17 [1] : vector<8x128xf32> to vector<8xf32>
    %21 = vector.shape_cast %20 : vector<8xf32> to vector<8x1xf32>
    %22 = vector.broadcast %21 : vector<8x1xf32> to vector<8x128xf32>
    %23 = arith.subf %19, %22 : vector<8x128xf32>
    %24 = math.exp %23 : vector<8x128xf32>
    %cst_18 = arith.constant dense<0.000000e+00> : vector<8xf32>
    %25 = vector.multi_reduction <add>, %24, %cst_18 [1] : vector<8x128xf32> to vector<8xf32>
    %26 = vector.shape_cast %25 : vector<8xf32> to vector<8x1xf32>
    %27 = math.log %26 : vector<8x1xf32>
    %28 = arith.addf %27, %21 : vector<8x1xf32>
    %29 = vector.broadcast %28 : vector<8x1xf32> to vector<8x128xf32>
    %30 = arith.subf %19, %29 : vector<8x128xf32>
    %c0_19 = arith.constant 0 : index
    %c0_20 = arith.constant 0 : index
    %31 = vector.load %arg8[%c0_19, %c0_20] : memref<8x128xf32, #tpu.memory_space<vmem>>, vector<8x128xf32>
    tpu.vector_store %arg8[%c0_19, %c0_20], %30 {strides = array<i32>} : memref<8x128xf32, #tpu.memory_space<vmem>>, vector<8x128xf32>,
    return
  }
  func.func @transform_0(%arg0: i32) -> (i32, i32) {
    %c0_i32 = arith.constant 0 : i32
    %c0_i32_0 = arith.constant 0 : i32
    return %arg0, %c0_i32 : i32, i32
  }
  func.func @transform_1(%arg0: i32) -> (i32, i32) {
    %c0_i32 = arith.constant 0 : i32
    %c0_i32_0 = arith.constant 0 : i32
    %c0_i32_1 = arith.constant 0 : i32
    return %c0_i32, %c0_i32_0 : i32, i32
  }
  func.func @transform_2(%arg0: i32) -> (i32, i32) {
    %c0_i32 = arith.constant 0 : i32
    %c0_i32_0 = arith.constant 0 : i32
    %c0_i32_1 = arith.constant 0 : i32
    return %c0_i32, %c0_i32_0 : i32, i32
  }
  func.func @transform_3(%arg0: i32) -> (i32, i32) {
    %c0_i32 = arith.constant 0 : i32
    %c0_i32_0 = arith.constant 0 : i32
    %c0_i32_1 = arith.constant 0 : i32
    return %c0_i32, %c0_i32_0 : i32, i32
  }
  func.func @transform_4(%arg0: i32) -> (i32, i32) {
    %c0_i32 = arith.constant 0 : i32
    %c0_i32_0 = arith.constant 0 : i32
    %c0_i32_1 = arith.constant 0 : i32
    return %c0_i32, %c0_i32_0 : i32, i32
  }
  func.func @transform_5(%arg0: i32) -> (i32, i32) {
    %c0_i32 = arith.constant 0 : i32
    %c0_i32_0 = arith.constant 0 : i32
    %c0_i32_1 = arith.constant 0 : i32
    return %c0_i32, %c0_i32_0 : i32, i32
  }
  func.func @transform_6(%arg0: i32) -> (i32, i32) {
    %c0_i32 = arith.constant 0 : i32
    %c0_i32_0 = arith.constant 0 : i32
    %c0_i32_1 = arith.constant 0 : i32
    return %c0_i32, %c0_i32_0 : i32, i32
  }
  func.func @transform_7(%arg0: i32) -> (i32, i32) {
    %c0_i32 = arith.constant 0 : i32
    %c0_i32_0 = arith.constant 0 : i32
    return %arg0, %c0_i32 : i32, i32
  }
}

module attributes {stable_mosaic.version = 11 : i64} {
  func.func @_mlp_kernel(%arg0: i32, %arg1: memref<8x32xf32, #tpu.memory_space<vmem>>, %arg2: memref<32x128xf32, #tpu.memory_space<vmem>>, %arg3: memref<1x128xf32, #tpu.memory_space<vmem>>, %arg4: memref<128x128xf32, #tpu.memory_space<vmem>>, %arg5: memref<1x128xf32, #tpu.memory_space<vmem>>, %arg6: memref<128x128xf32, #tpu.memory_space<vmem>>, %arg7: memref<1x128xf32, #tpu.memory_space<vmem>>, %arg8: memref<8x128xf32, #tpu.memory_space<vmem>>) attributes {dimension_semantics = [#tpu.dimension_semantics<parallel>], iteration_bounds = array<i64: 1>, scalar_prefetch = 0 : i64, scratch_operands = 0 : i64, tpu.core_type = #tpu.core_type<tc>, window_params = [{transform_indices = @transform_0, window_bounds = array<i64: 8, 32>}, {pipeline_mode = #tpu.pipeline_mode<synchronous>, transform_indices = @transform_1, window_bounds = array<i64: 32, 128>}, {pipeline_mode = #tpu.pipeline_mode<synchronous>, transform_indices = @transform_2, window_bounds = array<i64: 1, 128>}, {pipeline_mode = #tpu.pipeline_mode<synchronous>, transform_indices = @transform_3, window_bounds = array<i64: 128, 128>}, {pipeline_mode = #tpu.pipeline_mode<synchronous>, transform_indices = @transform_4, window_bounds = array<i64: 1, 128>}, {pipeline_mode = #tpu.pipeline_mode<synchronous>, transform_indices = @transform_5, window_bounds = array<i64: 128, 128>}, {pipeline_mode = #tpu.pipeline_mode<synchronous>, transform_indices = @transform_6, window_bounds = array<i64: 1, 128>}, {transform_indices = @transform_7, window_bounds = array<i64: 8, 128>}]} {
    %c0 = arith.constant 0 : index
    %c0_0 = arith.constant 0 : index
    %0 = vector.load %arg1[%c0, %c0_0] : memref<8x32xf32, #tpu.memory_space<vmem>>, vector<8x32xf32>
    %c0_1 = arith.constant 0 : index
    %c0_2 = arith.constant 0 : index
    %1 = vector.load %arg2[%c0_1, %c0_2] : memref<32x128xf32, #tpu.memory_space<vmem>>, vector<32x128xf32>
    %c0_3 = arith.constant 0 : index
    %c0_4 = arith.constant 0 : index
    %2 = vector.load %arg3[%c0_3, %c0_4] : memref<1x128xf32, #tpu.memory_space<vmem>>, vector<1x128xf32>
    %cst = arith.constant dense<0.000000e+00> : vector<8x128xf32>
    %3 = tpu.matmul %0, %1, %cst {dimension_numbers = #tpu.dot_dimension_numbers<[1], [0], [0], [1], [0, 0, 1, 1], [], []>} : vector<8x32xf32>, vector<32x128xf32>, vector<8x128xf32> -> vector<8x128xf32>
    %4 = vector.broadcast %2 : vector<1x128xf32> to vector<8x128xf32>
    %5 = arith.addf %3, %4 : vector<8x128xf32>
    %cst_5 = arith.constant 0.000000e+00 : f32
    %6 = vector.broadcast %cst_5 : f32 to vector<8x128xf32>
    %7 = arith.maximumf %5, %6 : vector<8x128xf32>
    %c0_6 = arith.constant 0 : index
    %c0_7 = arith.constant 0 : index
    %8 = vector.load %arg4[%c0_6, %c0_7] : memref<128x128xf32, #tpu.memory_space<vmem>>, vector<128x128xf32>
    %c0_8 = arith.constant 0 : index
    %c0_9 = arith.constant 0 : index
    %9 = vector.load %arg5[%c0_8, %c0_9] : memref<1x128xf32, #tpu.memory_space<vmem>>, vector<1x128xf32>
    %cst_10 = arith.constant dense<0.000000e+00> : vector<8x128xf32>
    %10 = tpu.matmul %7, %8, %cst_10 {dimension_numbers = #tpu.dot_dimension_numbers<[1], [0], [0], [1], [0, 0, 1, 1], [], []>} : vector<8x128xf32>, vector<128x128xf32>, vector<8x128xf32> -> vector<8x128xf32>
    %11 = vector.broadcast %9 : vector<1x128xf32> to vector<8x128xf32>
    %12 = arith.addf %10, %11 : vector<8x128xf32>
    %cst_11 = arith.constant 0.000000e+00 : f32
    %13 = vector.broadcast %cst_11 : f32 to vector<8x128xf32>
    %14 = arith.maximumf %12, %13 : vector<8x128xf32>
    %c0_12 = arith.constant 0 : index
    %c0_13 = arith.constant 0 : index
    %15 = vector.load %arg6[%c0_12, %c0_13] : memref<128x128xf32, #tpu.memory_space<vmem>>, vector<128x128xf32>
    %cst_14 = arith.constant dense<0.000000e+00> : vector<8x128xf32>
    %16 = tpu.matmul %14, %15, %cst_14 {dimension_numbers = #tpu.dot_dimension_numbers<[1], [0], [0], [1], [0, 0, 1, 1], [], []>} : vector<8x128xf32>, vector<128x128xf32>, vector<8x128xf32> -> vector<8x128xf32>
    %c0_15 = arith.constant 0 : index
    %c0_16 = arith.constant 0 : index
    %17 = vector.load %arg7[%c0_15, %c0_16] : memref<1x128xf32, #tpu.memory_space<vmem>>, vector<1x128xf32>
    %18 = vector.broadcast %17 : vector<1x128xf32> to vector<8x128xf32>
    %19 = arith.addf %16, %18 : vector<8x128xf32>
    %cst_17 = arith.constant dense<0xFF800000> : vector<8xf32>
    %20 = vector.multi_reduction <maximumf>, %19, %cst_17 [1] : vector<8x128xf32> to vector<8xf32>
    %21 = vector.shape_cast %20 : vector<8xf32> to vector<8x1xf32>
    %22 = vector.broadcast %21 : vector<8x1xf32> to vector<8x128xf32>
    %23 = arith.subf %19, %22 : vector<8x128xf32>
    %24 = math.exp %23 : vector<8x128xf32>
    %cst_18 = arith.constant dense<0.000000e+00> : vector<8xf32>
    %25 = vector.multi_reduction <add>, %24, %cst_18 [1] : vector<8x128xf32> to vector<8xf32>
    %26 = vector.shape_cast %25 : vector<8xf32> to vector<8x1xf32>
    %27 = math.log %26 : vector<8x1xf32>
    %28 = arith.addf %27, %21 : vector<8x1xf32>
    %29 = vector.broadcast %28 : vector<8x1xf32> to vector<8x128xf32>
    %30 = arith.subf %19, %29 : vector<8x128xf32>
    %c0_19 = arith.constant 0 : index
    %c0_20 = arith.constant 0 : index
    %31 = vector.load %arg8[%c0_19, %c0_20] : memref<8x128xf32, #tpu.memory_space<vmem>>, vector<8x128xf32>
    tpu.vector_store %arg8[%c0_19, %c0_20], %30 {strides = array<i32>} : memref<8x128xf32, #tpu.memory_space<vmem>>, vector<8x128xf32>,
    return
  }
  func.func @transform_0(%arg0: i32) -> (i32, i32) {
    %c0_i32 = arith.constant 0 : i32
    %c0_i32_0 = arith.constant 0 : i32
    return %arg0, %c0_i32 : i32, i32
  }
  func.func @transform_1(%arg0: i32) -> (i32, i32) {
    %c0_i32 = arith.constant 0 : i32
    %c0_i32_0 = arith.constant 0 : i32
    %c0_i32_1 = arith.constant 0 : i32
    return %c0_i32, %c0_i32_0 : i32, i32
  }
  func.func @transform_2(%arg0: i32) -> (i32, i32) {
    %c0_i32 = arith.constant 0 : i32
    %c0_i32_0 = arith.constant 0 : i32
    %c0_i32_1 = arith.constant 0 : i32
    return %c0_i32, %c0_i32_0 : i32, i32
  }
  func.func @transform_3(%arg0: i32) -> (i32, i32) {
    %c0_i32 = arith.constant 0 : i32
    %c0_i32_0 = arith.constant 0 : i32
    %c0_i32_1 = arith.constant 0 : i32
    return %c0_i32, %c0_i32_0 : i32, i32
  }
  func.func @transform_4(%arg0: i32) -> (i32, i32) {
    %c0_i32 = arith.constant 0 : i32
    %c0_i32_0 = arith.constant 0 : i32
    %c0_i32_1 = arith.constant 0 : i32
    return %c0_i32, %c0_i32_0 : i32, i32
  }
  func.func @transform_5(%arg0: i32) -> (i32, i32) {
    %c0_i32 = arith.constant 0 : i32
    %c0_i32_0 = arith.constant 0 : i32
    %c0_i32_1 = arith.constant 0 : i32
    return %c0_i32, %c0_i32_0 : i32, i32
  }
  func.func @transform_6(%arg0: i32) -> (i32, i32) {
    %c0_i32 = arith.constant 0 : i32
    %c0_i32_0 = arith.constant 0 : i32
    %c0_i32_1 = arith.constant 0 : i32
    return %c0_i32, %c0_i32_0 : i32, i32
  }
  func.func @transform_7(%arg0: i32) -> (i32, i32) {
    %c0_i32 = arith.constant 0 : i32
    %c0_i32_0 = arith.constant 0 : i32
    return %arg0, %c0_i32 : i32, i32
  }
}

</mosaic_0001>

<llo_original>
// kernel: _forward_impl.1
$region0: #{_forward_impl.1}
  #allocation0 [shape = 'u32[]', space=smem, size = 0x4, offset = 0x4, fixed_abs, tag = 'smem constant byte address 0x4 - core index']
  #allocation1 [shape = 'u32[144,128]{1,0:T(1,128)}', space=vmem, size = 0x12000, scoped, tag = 'internal scratch']
  %s0 = inlined_call_operand.hbm [shape: f32[8,32], index: 0, kind: input, shape index: {}]
  %s1 = inlined_call_operand.hbm [shape: f32[32,128], index: 1, kind: input, shape index: {}]
  %s2 = inlined_call_operand.vmem [shape: f32[1,128], index: 2, kind: input, shape index: {}]
  %s3 = inlined_call_operand.hbm [shape: f32[128,128], index: 3, kind: input, shape index: {}]
  %s4 = inlined_call_operand.vmem [shape: f32[1,128], index: 4, kind: input, shape index: {}]
  %s5 = inlined_call_operand.hbm [shape: f32[128,128], index: 5, kind: input, shape index: {}]
  %s6 = inlined_call_operand.vmem [shape: f32[1,128], index: 6, kind: input, shape index: {}]
  %s7 = inlined_call_operand.hbm [shape: f32[8,128], index: 7, kind: output, shape index: {}]
  %s8 = sld [smem:[#allocation0]]
  $region54: #{_forward_impl.1} parent=0
    _
  %s10 = ssub.s32 1, %s8
  %s11 = scalar_select 0, %s10, %s8
  $region1: #{_forward_impl.1} parent=0
    #allocation2 [shape = 'u8[4096]{0}', space=vmem, size = 0x1000, scoped, tag = 'input window, operand 0, single buffered']
    #allocation3 [shape = 's32[1]{0}', space=sflag, size = 0x4, scoped, tag = 'scoped memory for _forward_impl.1']
    #allocation4 [shape = 's32[1]{0}', space=sflag, size = 0x4, scoped, tag = 'scoped memory for _forward_impl.1']
    #allocation5 [shape = 'u8[16384]{0}', space=vmem, size = 0x4000, scoped, tag = 'input window, operand 1, single buffered']
    #allocation6 [shape = 's32[1]{0}', space=sflag, size = 0x4, scoped, tag = 'scoped memory for _forward_impl.1']
    #allocation7 [shape = 'u8[65536]{0}', space=vmem, size = 0x10000, scoped, tag = 'input window, operand 3, single buffered']
    #allocation8 [shape = 'u8[65536]{0}', space=vmem, size = 0x10000, scoped, tag = 'input window, operand 5, single buffered']
    #allocation9 [shape = 's32[1]{0}', space=sflag, size = 0x4, scoped, tag = 'scoped memory for _forward_impl.1']
    #allocation10 [shape = 'u8[4096]{0}', space=vmem, size = 0x1000, scoped, tag = 'output window, operand 0, single buffered']
    %12 = vsyncpa [#allocation3], 0
    %13 = vsyncpa [#allocation6], 0
    %14 = vsyncpa [#allocation9], 0
    %15 = vsyncpa [#allocation4], 0
    // Predicated region
    $region2: #{_forward_impl.1} parent=1 // pred_check
      _
    $region3: #{_forward_impl.1} parent=1 // pred_check_branch
      %17 = sbr.rel (0) target = $region5
    $region4: #{_forward_impl.1} parent=1 // pred_region
      %s19 = ssub.s32 128, 128
      %20 = vsyncadd [#allocation3], %s19
      %s22 = sshll.u32 [#allocation2], 4
      %s23 = int_to_ptr.vmem [resolvable:$true] %s22
      %25 = dma.hbm_to_vmem [thread:$0]  %s0, 128, %s23, [#allocation3]
    $region5: #{_forward_impl.1} parent=1 // pred_fallthru
      _
    // Predicated region
    $region6: #{_forward_impl.1} parent=1 // pred_check
      _
    $region7: #{_forward_impl.1} parent=1 // pred_check_branch
      %27 = sbr.rel (0) target = $region9
    $region8: #{_forward_impl.1} parent=1 // pred_region
      %s29 = ssub.s32 512, 512
      %30 = vsyncadd [#allocation6], %s29
      %s31 = sshll.u32 [#allocation5], 4
      %s32 = int_to_ptr.vmem [resolvable:$true] %s31
      %37 = dma.hbm_to_vmem [thread:$0]  %s1, 512, %s32, [#allocation6], 128, 128, 8
    $region9: #{_forward_impl.1} parent=1 // pred_fallthru
      _
    // Predicated region
    $region10: #{_forward_impl.1} parent=1 // pred_check
      _
    $region11: #{_forward_impl.1} parent=1 // pred_check_branch
      %39 = sbr.rel (0) target = $region13
    $region12: #{_forward_impl.1} parent=1 // pred_region
      _
    $region13: #{_forward_impl.1} parent=1 // pred_fallthru
      _
    // Predicated region
    $region14: #{_forward_impl.1} parent=1 // pred_check
      _
    $region15: #{_forward_impl.1} parent=1 // pred_check_branch
      %41 = sbr.rel (0) target = $region17
    $region16: #{_forward_impl.1} parent=1 // pred_region
      %s43 = ssub.s32 2048, 2048
      %44 = vsyncadd [#allocation6], %s43
      %s45 = sshll.u32 [#allocation7], 4
      %s46 = int_to_ptr.vmem [resolvable:$true] %s45
      %51 = dma.hbm_to_vmem [thread:$0]  %s3, 2048, %s46, [#allocation6], 128, 128, 8
    $region17: #{_forward_impl.1} parent=1 // pred_fallthru
      _
    // Predicated region
    $region18: #{_forward_impl.1} parent=1 // pred_check
      _
    $region19: #{_forward_impl.1} parent=1 // pred_check_branch
      %53 = sbr.rel (0) target = $region21
    $region20: #{_forward_impl.1} parent=1 // pred_region
      _
    $region21: #{_forward_impl.1} parent=1 // pred_fallthru
      _
    // Predicated region
    $region22: #{_forward_impl.1} parent=1 // pred_check
      _
    $region23: #{_forward_impl.1} parent=1 // pred_check_branch
      %55 = sbr.rel (0) target = $region25
    $region24: #{_forward_impl.1} parent=1 // pred_region
      %s57 = ssub.s32 2048, 2048
      %58 = vsyncadd [#allocation9], %s57
      %s59 = sshll.u32 [#allocation8], 4
      %s60 = int_to_ptr.vmem [resolvable:$true] %s59
      %65 = dma.hbm_to_vmem [thread:$0]  %s5, 2048, %s60, [#allocation9], 128, 128, 8
    $region25: #{_forward_impl.1} parent=1 // pred_fallthru
      _
    // Predicated region
    $region26: #{_forward_impl.1} parent=1 // pred_check
      _
    $region27: #{_forward_impl.1} parent=1 // pred_check_branch
      %67 = sbr.rel (0) target = $region29
    $region28: #{_forward_impl.1} parent=1 // pred_region
      _
    $region29: #{_forward_impl.1} parent=1 // pred_fallthru
      _
    // Predicated region
    $region30: #{_forward_impl.1} parent=1 // pred_check
      _
    $region31: #{_forward_impl.1} parent=1 // pred_check_branch
      %69 = sbr.rel (0) target = $region33
    $region32: #{_forward_impl.1} parent=1 // pred_region
      %70 = dma.done [#allocation3], 128
    $region33: #{_forward_impl.1} parent=1 // pred_fallthru
      _
    // Predicated region
    $region34: #{_forward_impl.1} parent=1 // pred_check
      _
    $region35: #{_forward_impl.1} parent=1 // pred_check_branch
      %72 = sbr.rel (0) target = $region37
    $region36: #{_forward_impl.1} parent=1 // pred_region
      %73 = dma.done [#allocation6], 512
    $region37: #{_forward_impl.1} parent=1 // pred_fallthru
      _
    // Predicated region
    $region38: #{_forward_impl.1} parent=1 // pred_check
      _
    $region39: #{_forward_impl.1} parent=1 // pred_check_branch
      %75 = sbr.rel (0) target = $region41
    $region40: #{_forward_impl.1} parent=1 // pred_region
      %76 = dma.done [#allocation6], 2048
    $region41: #{_forward_impl.1} parent=1 // pred_fallthru
      _
    // Predicated region
    $region42: #{_forward_impl.1} parent=1 // pred_check
      _
    $region43: #{_forward_impl.1} parent=1 // pred_check_branch
      %78 = sbr.rel (0) target = $region45
    $region44: #{_forward_impl.1} parent=1 // pred_region
      %79 = dma.done [#allocation9], 2048
    $region45: #{_forward_impl.1} parent=1 // pred_fallthru
      _
    %v80 = vld [vmem:[#allocation2] sm:$0xff]
    %v81 = vld [vmem:[#allocation5] sm:$0xff]
    %v82 = vld [vmem:[#allocation5 + $0x8] sm:$0xff]
    %v83 = vld [vmem:[#allocation5 + $0x10] sm:$0xff]
    %v84 = vld [vmem:[#allocation5 + $0x18] sm:$0xff]
    %v85 = vld [vmem:[%s2] sm:$0x1]
    %v87 = vlaneseq
    %v88 = vshrl.u32 %v87, 7
    %v89 = vsub.s32 0, %v88
    %v90 = vrot.slane %v85, %v89
    %vm92 = vcmask 261120
    %v94 = vsel %vm92, %v80, 0
    %96 = vmatprep.subr.mxu0 0.0
    %97 = vmatpush1.msra.mxu0 0.0
    %98 = vmatprep.subr.mxu0 0.0
    %99 = vmatpush1.msra.mxu0 0.0
    %100 = vmatprep.subr.mxu0 0.0
    %101 = vmatpush1.msra.mxu0 0.0
    %102 = vmatprep.subr.mxu0 0.0
    %103 = vmatpush1.msra.mxu0 0.0
    %104 = vmatprep.subr.mxu0 0.0
    %105 = vmatpush1.msra.mxu0 0.0
    %106 = vmatprep.subr.mxu0 0.0
    %107 = vmatpush1.msra.mxu0 0.0
    %108 = vmatprep.subr.mxu0 0.0
    %109 = vmatpush1.msra.mxu0 0.0
    %110 = vmatprep.subr.mxu0 0.0
    %111 = vmatpush1.msra.mxu0 0.0
    %112 = vmatprep.subr.mxu0 0.0
    %113 = vmatpush1.msra.mxu0 0.0
    %114 = vmatprep.subr.mxu0 0.0
    %115 = vmatpush1.msra.mxu0 0.0
    %116 = vmatprep.subr.mxu0 0.0
    %117 = vmatpush1.msra.mxu0 0.0
    %118 = vmatprep.subr.mxu0 0.0
    %119 = vmatpush1.msra.mxu0 0.0
    %120 = vmatprep.subr.mxu0 0.0
    %121 = vmatpush1.msra.mxu0 %v84
    %122 = vmatprep.subr.mxu0 0.0
    %123 = vmatpush1.msra.mxu0 %v83
    %124 = vmatprep.subr.mxu0 0.0
    %125 = vmatpush1.msra.mxu0 %v82
    %126 = vmatprep.subr.mxu0 0.0
    %127 = vmatpush1.msra.mxu0 %v81
    %128 = vmatprep.subr.mxu0 0.0
    %129 = vmatpush2.msra.mxu0 0.0
    %130 = vmatprep.subr.mxu0 0.0
    %131 = vmatpush2.msra.mxu0 0.0
    %132 = vmatprep.subr.mxu0 0.0
    %133 = vmatpush2.msra.mxu0 0.0
    %134 = vmatprep.subr.mxu0 0.0
    %135 = vmatpush2.msra.mxu0 0.0
    %136 = vmatprep.subr.mxu0 0.0
    %137 = vmatpush2.msra.mxu0 0.0
    %138 = vmatprep.subr.mxu0 0.0
    %139 = vmatpush2.msra.mxu0 0.0
    %140 = vmatprep.subr.mxu0 0.0
    %141 = vmatpush2.msra.mxu0 0.0
    %142 = vmatprep.subr.mxu0 0.0
    %143 = vmatpush2.msra.mxu0 0.0
    %144 = vmatprep.subr.mxu0 0.0
    %145 = vmatpush2.msra.mxu0 0.0
    %146 = vmatprep.subr.mxu0 0.0
    %147 = vmatpush2.msra.mxu0 0.0
    %148 = vmatprep.subr.mxu0 0.0
    %149 = vmatpush2.msra.mxu0 0.0
    %150 = vmatprep.subr.mxu0 0.0
    %151 = vmatpush2.msra.mxu0 0.0
    %152 = vmatprep.subr.mxu0 0.0
    %153 = vmatpush2.msra.mxu0 0.0
    %154 = vmatprep.subr.mxu0 0.0
    %155 = vmatpush2.msra.mxu0 0.0
    %156 = vmatprep.subr.mxu0 0.0
    %157 = vmatpush2.msra.mxu0 0.0
    %158 = vmatprep.subr.mxu0 0.0
    %159 = vmatpush2.msra.mxu0 0.0
    %160 = vmatprep.mubr.f32.mxu0 0.0
    %161 = vmatmul.mubr.f32.gmra.mxu0 %v94
    %v162 = vpop.f32.mrf.mxu0
    %v163 = vadd.f32 %v90, %v162
    %v164 = vpop.f32.mrf.mxu0
    %165 = vdwg.mxu0
    %v166 = vmax.f32 %v163, 0.0
    %v167 = vld [vmem:[#allocation7] sm:$0xff]
    %v168 = vld [vmem:[#allocation7 + $0x8] sm:$0xff]
    %v169 = vld [vmem:[#allocation7 + $0x10] sm:$0xff]
    %v170 = vld [vmem:[#allocation7 + $0x18] sm:$0xff]
    %v171 = vld [vmem:[#allocation7 + $0x20] sm:$0xff]
    %v172 = vld [vmem:[#allocation7 + $0x28] sm:$0xff]
    %v173 = vld [vmem:[#allocation7 + $0x30] sm:$0xff]
    %v174 = vld [vmem:[#allocation7 + $0x38] sm:$0xff]
    %v175 = vld [vmem:[#allocation7 + $0x40] sm:$0xff]
    %v176 = vld [vmem:[#allocation7 + $0x48] sm:$0xff]
    %v177 = vld [vmem:[#allocation7 + $0x50] sm:$0xff]
    %v178 = vld [vmem:[#allocation7 + $0x58] sm:$0xff]
    %v179 = vld [vmem:[#allocation7 + $0x60] sm:$0xff]
    %v180 = vld [vmem:[#allocation7 + $0x68] sm:$0xff]
    %v181 = vld [vmem:[#allocation7 + $0x70] sm:$0xff]
    %v182 = vld [vmem:[#allocation7 + $0x78] sm:$0xff]
    %v183 = vld [vmem:[%s4] sm:$0x1]
    %v185 = vlaneseq
    %v186 = vshrl.u32 %v185, 7
    %v187 = vsub.s32 0, %v186
    %v188 = vrot.slane %v183, %v187
    %190 = vmatprep.subr.mxu0 0.0
    %191 = vmatpush1.msra.mxu0 %v182
    %192 = vmatprep.subr.mxu0 0.0
    %193 = vmatpush1.msra.mxu0 %v181
    %194 = vmatprep.subr.mxu0 0.0
    %195 = vmatpush1.msra.mxu0 %v180
    %196 = vmatprep.subr.mxu0 0.0
    %197 = vmatpush1.msra.mxu0 %v179
    %198 = vmatprep.subr.mxu0 0.0
    %199 = vmatpush1.msra.mxu0 %v178
    %200 = vmatprep.subr.mxu0 0.0
    %201 = vmatpush1.msra.mxu0 %v177
    %202 = vmatprep.subr.mxu0 0.0
    %203 = vmatpush1.msra.mxu0 %v176
    %204 = vmatprep.subr.mxu0 0.0
    %205 = vmatpush1.msra.mxu0 %v175
    %206 = vmatprep.subr.mxu0 0.0
    %207 = vmatpush1.msra.mxu0 %v174
    %208 = vmatprep.subr.mxu0 0.0
    %209 = vmatpush1.msra.mxu0 %v173
    %210 = vmatprep.subr.mxu0 0.0
    %211 = vmatpush1.msra.mxu0 %v172
    %212 = vmatprep.subr.mxu0 0.0
    %213 = vmatpush1.msra.mxu0 %v171
    %214 = vmatprep.subr.mxu0 0.0
    %215 = vmatpush1.msra.mxu0 %v170
    %216 = vmatprep.subr.mxu0 0.0
    %217 = vmatpush1.msra.mxu0 %v169
    %218 = vmatprep.subr.mxu0 0.0
    %219 = vmatpush1.msra.mxu0 %v168
    %220 = vmatprep.subr.mxu0 0.0
    %221 = vmatpush1.msra.mxu0 %v167
    %222 = vmatprep.subr.mxu0 0.0
    %223 = vmatpush2.msra.mxu0 0.0
    %224 = vmatprep.subr.mxu0 0.0
    %225 = vmatpush2.msra.mxu0 0.0
    %226 = vmatprep.subr.mxu0 0.0
    %227 = vmatpush2.msra.mxu0 0.0
    %228 = vmatprep.subr.mxu0 0.0
    %229 = vmatpush2.msra.mxu0 0.0
    %230 = vmatprep.subr.mxu0 0.0
    %231 = vmatpush2.msra.mxu0 0.0
    %232 = vmatprep.subr.mxu0 0.0
    %233 = vmatpush2.msra.mxu0 0.0
    %234 = vmatprep.subr.mxu0 0.0
    %235 = vmatpush2.msra.mxu0 0.0
    %236 = vmatprep.subr.mxu0 0.0
    %237 = vmatpush2.msra.mxu0 0.0
    %238 = vmatprep.subr.mxu0 0.0
    %239 = vmatpush2.msra.mxu0 0.0
    %240 = vmatprep.subr.mxu0 0.0
    %241 = vmatpush2.msra.mxu0 0.0
    %242 = vmatprep.subr.mxu0 0.0
    %243 = vmatpush2.msra.mxu0 0.0
    %244 = vmatprep.subr.mxu0 0.0
    %245 = vmatpush2.msra.mxu0 0.0
    %246 = vmatprep.subr.mxu0 0.0
    %247 = vmatpush2.msra.mxu0 0.0
    %248 = vmatprep.subr.mxu0 0.0
    %249 = vmatpush2.msra.mxu0 0.0
    %250 = vmatprep.subr.mxu0 0.0
    %251 = vmatpush2.msra.mxu0 0.0
    %252 = vmatprep.subr.mxu0 0.0
    %253 = vmatpush2.msra.mxu0 0.0
    %254 = vmatprep.mubr.f32.mxu0 0.0
    %255 = vmatmul.mubr.f32.gmra.mxu0 %v166
    %v256 = vpop.f32.mrf.mxu0
    %v257 = vadd.f32 %v188, %v256
    %v258 = vpop.f32.mrf.mxu0
    %259 = vdwg.mxu0
    %v260 = vmax.f32 %v257, 0.0
    %v261 = vld [vmem:[#allocation8] sm:$0xff]
    %v262 = vld [vmem:[#allocation8 + $0x8] sm:$0xff]
    %v263 = vld [vmem:[#allocation8 + $0x10] sm:$0xff]
    %v264 = vld [vmem:[#allocation8 + $0x18] sm:$0xff]
    %v265 = vld [vmem:[#allocation8 + $0x20] sm:$0xff]
    %v266 = vld [vmem:[#allocation8 + $0x28] sm:$0xff]
    %v267 = vld [vmem:[#allocation8 + $0x30] sm:$0xff]
    %v268 = vld [vmem:[#allocation8 + $0x38] sm:$0xff]
    %v269 = vld [vmem:[#allocation8 + $0x40] sm:$0xff]
    %v270 = vld [vmem:[#allocation8 + $0x48] sm:$0xff]
    %v271 = vld [vmem:[#allocation8 + $0x50] sm:$0xff]
    %v272 = vld [vmem:[#allocation8 + $0x58] sm:$0xff]
    %v273 = vld [vmem:[#allocation8 + $0x60] sm:$0xff]
    %v274 = vld [vmem:[#allocation8 + $0x68] sm:$0xff]
    %v275 = vld [vmem:[#allocation8 + $0x70] sm:$0xff]
    %v276 = vld [vmem:[#allocation8 + $0x78] sm:$0xff]
    %v277 = vld [vmem:[%s6] sm:$0x1]
    %v279 = vlaneseq
    %v280 = vshrl.u32 %v279, 7
    %v281 = vsub.s32 0, %v280
    %v282 = vrot.slane %v277, %v281
    %284 = vmatprep.subr.mxu0 0.0
    %285 = vmatpush1.msra.mxu0 %v276
    %286 = vmatprep.subr.mxu0 0.0
    %287 = vmatpush1.msra.mxu0 %v275
    %288 = vmatprep.subr.mxu0 0.0
    %289 = vmatpush1.msra.mxu0 %v274
    %290 = vmatprep.subr.mxu0 0.0
    %291 = vmatpush1.msra.mxu0 %v273
    %292 = vmatprep.subr.mxu0 0.0
    %293 = vmatpush1.msra.mxu0 %v272
    %294 = vmatprep.subr.mxu0 0.0
    %295 = vmatpush1.msra.mxu0 %v271
    %296 = vmatprep.subr.mxu0 0.0
    %297 = vmatpush1.msra.mxu0 %v270
    %298 = vmatprep.subr.mxu0 0.0
    %299 = vmatpush1.msra.mxu0 %v269
    %300 = vmatprep.subr.mxu0 0.0
    %301 = vmatpush1.msra.mxu0 %v268
    %302 = vmatprep.subr.mxu0 0.0
    %303 = vmatpush1.msra.mxu0 %v267
    %304 = vmatprep.subr.mxu0 0.0
    %305 = vmatpush1.msra.mxu0 %v266
    %306 = vmatprep.subr.mxu0 0.0
    %307 = vmatpush1.msra.mxu0 %v265
    %308 = vmatprep.subr.mxu0 0.0
    %309 = vmatpush1.msra.mxu0 %v264
    %310 = vmatprep.subr.mxu0 0.0
    %311 = vmatpush1.msra.mxu0 %v263
    %312 = vmatprep.subr.mxu0 0.0
    %313 = vmatpush1.msra.mxu0 %v262
    %314 = vmatprep.subr.mxu0 0.0
    %315 = vmatpush1.msra.mxu0 %v261
    %316 = vmatprep.subr.mxu0 0.0
    %317 = vmatpush2.msra.mxu0 0.0
    %318 = vmatprep.subr.mxu0 0.0
    %319 = vmatpush2.msra.mxu0 0.0
    %320 = vmatprep.subr.mxu0 0.0
    %321 = vmatpush2.msra.mxu0 0.0
    %322 = vmatprep.subr.mxu0 0.0
    %323 = vmatpush2.msra.mxu0 0.0
    %324 = vmatprep.subr.mxu0 0.0
    %325 = vmatpush2.msra.mxu0 0.0
    %326 = vmatprep.subr.mxu0 0.0
    %327 = vmatpush2.msra.mxu0 0.0
    %328 = vmatprep.subr.mxu0 0.0
    %329 = vmatpush2.msra.mxu0 0.0
    %330 = vmatprep.subr.mxu0 0.0
    %331 = vmatpush2.msra.mxu0 0.0
    %332 = vmatprep.subr.mxu0 0.0
    %333 = vmatpush2.msra.mxu0 0.0
    %334 = vmatprep.subr.mxu0 0.0
    %335 = vmatpush2.msra.mxu0 0.0
    %336 = vmatprep.subr.mxu0 0.0
    %337 = vmatpush2.msra.mxu0 0.0
    %338 = vmatprep.subr.mxu0 0.0
    %339 = vmatpush2.msra.mxu0 0.0
    %340 = vmatprep.subr.mxu0 0.0
    %341 = vmatpush2.msra.mxu0 0.0
    %342 = vmatprep.subr.mxu0 0.0
    %343 = vmatpush2.msra.mxu0 0.0
    %344 = vmatprep.subr.mxu0 0.0
    %345 = vmatpush2.msra.mxu0 0.0
    %346 = vmatprep.subr.mxu0 0.0
    %347 = vmatpush2.msra.mxu0 0.0
    %348 = vmatprep.mubr.f32.mxu0 0.0
    %349 = vmatmul.mubr.f32.gmra.mxu0 %v260
    %v350 = vpop.f32.mrf.mxu0
    %v351 = vadd.f32 %v282, %v350
    %v352 = vpop.f32.mrf.mxu0
    %353 = vdwg.mxu0
    %354 = vmax.xlane.f32.xlu0 %v351
    %v355 = vpop.xlane.xlu0 %354
    %v356 = vsub.f32 %v351, %v355
    %v357 = vmul.f32 %v356, 1.442695
    %v358 = vpow.pop %v357
    %359 = vadd.xlane.f32.xlu0 %v358
    %v360 = vpop.xlane.xlu0 %359
    %v361 = vlog2.pop %v360
    %v362 = vmul.f32 %v361, 0.6931472
    %v363 = vadd.f32 %v362, %v355
    %v364 = vsub.f32 %v351, %v363
    %365 = vst [vmem:[#allocation10] sm:$0xff] %v364
    // Predicated region
    $region46: #{_forward_impl.1} parent=1 // pred_check
      _
    $region47: #{_forward_impl.1} parent=1 // pred_check_branch
      %367 = sbr.rel (0) target = $region49
    $region48: #{_forward_impl.1} parent=1 // pred_region
      %s369 = ssub.s32 128, 128
      %370 = vsyncadd [#allocation4], %s369
      %s372 = sshll.u32 [#allocation10], 4
      %s373 = int_to_ptr.vmem [resolvable:$true] %s372
      %375 = dma.vmem_to_hbm [thread:$0]  %s373, 128, %s7, [#allocation4]
    $region49: #{_forward_impl.1} parent=1 // pred_fallthru
      _
    // Predicated region
    $region50: #{_forward_impl.1} parent=1 // pred_check
      _
    $region51: #{_forward_impl.1} parent=1 // pred_check_branch
      %377 = sbr.rel (0) target = $region53
    $region52: #{_forward_impl.1} parent=1 // pred_region
      %378 = dma.done [#allocation4], 128
    $region53: #{_forward_impl.1} parent=1 // pred_fallthru
      _
    %379 = vsyncpa [#allocation3], 1
    %380 = vsyncpa [#allocation6], 1
    %381 = vsyncpa [#allocation9], 1
    %382 = vsyncpa [#allocation4], 1

// kernel: _forward_impl.1
$region0: #{_forward_impl.1}
  #allocation0 [shape = 'u32[]', space=smem, size = 0x4, offset = 0x4, fixed_abs, tag = 'smem constant byte address 0x4 - core index']
  #allocation1 [shape = 'u32[144,128]{1,0:T(1,128)}', space=vmem, size = 0x12000, scoped, tag = 'internal scratch']
  %s0 = inlined_call_operand.hbm [shape: f32[8,32], index: 0, kind: input, shape index: {}]
  %s1 = inlined_call_operand.hbm [shape: f32[32,128], index: 1, kind: input, shape index: {}]
  %s2 = inlined_call_operand.vmem [shape: f32[1,128], index: 2, kind: input, shape index: {}]
  %s3 = inlined_call_operand.hbm [shape: f32[128,128], index: 3, kind: input, shape index: {}]
  %s4 = inlined_call_operand.vmem [shape: f32[1,128], index: 4, kind: input, shape index: {}]
  %s5 = inlined_call_operand.hbm [shape: f32[128,128], index: 5, kind: input, shape index: {}]
  %s6 = inlined_call_operand.vmem [shape: f32[1,128], index: 6, kind: input, shape index: {}]
  %s7 = inlined_call_operand.hbm [shape: f32[8,128], index: 7, kind: output, shape index: {}]
  %s8 = sld [smem:[#allocation0]]
  $region54: #{_forward_impl.1} parent=0
    _
  %s10 = ssub.s32 1, %s8
  %s11 = scalar_select 0, %s10, %s8
  $region1: #{_forward_impl.1} parent=0
    #allocation2 [shape = 'u8[4096]{0}', space=vmem, size = 0x1000, scoped, tag = 'input window, operand 0, single buffered']
    #allocation3 [shape = 's32[1]{0}', space=sflag, size = 0x4, scoped, tag = 'scoped memory for _forward_impl.1']
    #allocation4 [shape = 's32[1]{0}', space=sflag, size = 0x4, scoped, tag = 'scoped memory for _forward_impl.1']
    #allocation5 [shape = 'u8[16384]{0}', space=vmem, size = 0x4000, scoped, tag = 'input window, operand 1, single buffered']
    #allocation6 [shape = 's32[1]{0}', space=sflag, size = 0x4, scoped, tag = 'scoped memory for _forward_impl.1']
    #allocation7 [shape = 'u8[65536]{0}', space=vmem, size = 0x10000, scoped, tag = 'input window, operand 3, single buffered']
    #allocation8 [shape = 'u8[65536]{0}', space=vmem, size = 0x10000, scoped, tag = 'input window, operand 5, single buffered']
    #allocation9 [shape = 's32[1]{0}', space=sflag, size = 0x4, scoped, tag = 'scoped memory for _forward_impl.1']
    #allocation10 [shape = 'u8[4096]{0}', space=vmem, size = 0x1000, scoped, tag = 'output window, operand 0, single buffered']
    %12 = vsyncpa [#allocation3], 0
    %13 = vsyncpa [#allocation6], 0
    %14 = vsyncpa [#allocation9], 0
    %15 = vsyncpa [#allocation4], 0
    // Predicated region
    $region2: #{_forward_impl.1} parent=1 // pred_check
      _
    $region3: #{_forward_impl.1} parent=1 // pred_check_branch
      %17 = sbr.rel (0) target = $region5
    $region4: #{_forward_impl.1} parent=1 // pred_region
      %s19 = ssub.s32 128, 128
      %20 = vsyncadd [#allocation3], %s19
      %s22 = sshll.u32 [#allocation2], 4
      %s23 = int_to_ptr.vmem [resolvable:$true] %s22
      %25 = dma.hbm_to_vmem [thread:$0]  %s0, 128, %s23, [#allocation3]
    $region5: #{_forward_impl.1} parent=1 // pred_fallthru
      _
    // Predicated region
    $region6: #{_forward_impl.1} parent=1 // pred_check
      _
    $region7: #{_forward_impl.1} parent=1 // pred_check_branch
      %27 = sbr.rel (0) target = $region9
    $region8: #{_forward_impl.1} parent=1 // pred_region
      %s29 = ssub.s32 512, 512
      %30 = vsyncadd [#allocation6], %s29
      %s31 = sshll.u32 [#allocation5], 4
      %s32 = int_to_ptr.vmem [resolvable:$true] %s31
      %37 = dma.hbm_to_vmem [thread:$0]  %s1, 512, %s32, [#allocation6], 128, 128, 8
    $region9: #{_forward_impl.1} parent=1 // pred_fallthru
      _
    // Predicated region
    $region10: #{_forward_impl.1} parent=1 // pred_check
      _
    $region11: #{_forward_impl.1} parent=1 // pred_check_branch
      %39 = sbr.rel (0) target = $region13
    $region12: #{_forward_impl.1} parent=1 // pred_region
      _
    $region13: #{_forward_impl.1} parent=1 // pred_fallthru
      _
    // Predicated region
    $region14: #{_forward_impl.1} parent=1 // pred_check
      _
    $region15: #{_forward_impl.1} parent=1 // pred_check_branch
      %41 = sbr.rel (0) target = $region17
    $region16: #{_forward_impl.1} parent=1 // pred_region
      %s43 = ssub.s32 2048, 2048
      %44 = vsyncadd [#allocation6], %s43
      %s45 = sshll.u32 [#allocation7], 4
      %s46 = int_to_ptr.vmem [resolvable:$true] %s45
      %51 = dma.hbm_to_vmem [thread:$0]  %s3, 2048, %s46, [#allocation6], 128, 128, 8
    $region17: #{_forward_impl.1} parent=1 // pred_fallthru
      _
    // Predicated region
    $region18: #{_forward_impl.1} parent=1 // pred_check
      _
    $region19: #{_forward_impl.1} parent=1 // pred_check_branch
      %53 = sbr.rel (0) target = $region21
    $region20: #{_forward_impl.1} parent=1 // pred_region
      _
    $region21: #{_forward_impl.1} parent=1 // pred_fallthru
      _
    // Predicated region
    $region22: #{_forward_impl.1} parent=1 // pred_check
      _
    $region23: #{_forward_impl.1} parent=1 // pred_check_branch
      %55 = sbr.rel (0) target = $region25
    $region24: #{_forward_impl.1} parent=1 // pred_region
      %s57 = ssub.s32 2048, 2048
      %58 = vsyncadd [#allocation9], %s57
      %s59 = sshll.u32 [#allocation8], 4
      %s60 = int_to_ptr.vmem [resolvable:$true] %s59
      %65 = dma.hbm_to_vmem [thread:$0]  %s5, 2048, %s60, [#allocation9], 128, 128, 8
    $region25: #{_forward_impl.1} parent=1 // pred_fallthru
      _
    // Predicated region
    $region26: #{_forward_impl.1} parent=1 // pred_check
      _
    $region27: #{_forward_impl.1} parent=1 // pred_check_branch
      %67 = sbr.rel (0) target = $region29
    $region28: #{_forward_impl.1} parent=1 // pred_region
      _
    $region29: #{_forward_impl.1} parent=1 // pred_fallthru
      _
    // Predicated region
    $region30: #{_forward_impl.1} parent=1 // pred_check
      _
    $region31: #{_forward_impl.1} parent=1 // pred_check_branch
      %69 = sbr.rel (0) target = $region33
    $region32: #{_forward_impl.1} parent=1 // pred_region
      %70 = dma.done [#allocation3], 128
    $region33: #{_forward_impl.1} parent=1 // pred_fallthru
      _
    // Predicated region
    $region34: #{_forward_impl.1} parent=1 // pred_check
      _
    $region35: #{_forward_impl.1} parent=1 // pred_check_branch
      %72 = sbr.rel (0) target = $region37
    $region36: #{_forward_impl.1} parent=1 // pred_region
      %73 = dma.done [#allocation6], 512
    $region37: #{_forward_impl.1} parent=1 // pred_fallthru
      _
    // Predicated region
    $region38: #{_forward_impl.1} parent=1 // pred_check
      _
    $region39: #{_forward_impl.1} parent=1 // pred_check_branch
      %75 = sbr.rel (0) target = $region41
    $region40: #{_forward_impl.1} parent=1 // pred_region
      %76 = dma.done [#allocation6], 2048
    $region41: #{_forward_impl.1} parent=1 // pred_fallthru
      _
    // Predicated region
    $region42: #{_forward_impl.1} parent=1 // pred_check
      _
    $region43: #{_forward_impl.1} parent=1 // pred_check_branch
      %78 = sbr.rel (0) target = $region45
    $region44: #{_forward_impl.1} parent=1 // pred_region
      %79 = dma.done [#allocation9], 2048
    $region45: #{_forward_impl.1} parent=1 // pred_fallthru
      _
    %v80 = vld [vmem:[#allocation2] sm:$0xff]
    %v81 = vld [vmem:[#allocation5] sm:$0xff]
    %v82 = vld [vmem:[#allocation5 + $0x8] sm:$0xff]
    %v83 = vld [vmem:[#allocation5 + $0x10] sm:$0xff]
    %v84 = vld [vmem:[#allocation5 + $0x18] sm:$0xff]
    %v85 = vld [vmem:[%s2] sm:$0x1]
    %v87 = vlaneseq
    %v88 = vshrl.u32 %v87, 7
    %v89 = vsub.s32 0, %v88
    %v90 = vrot.slane %v85, %v89
    %vm92 = vcmask 261120
    %v94 = vsel %vm92, %v80, 0
    %96 = vmatprep.subr.mxu0 0.0
    %97 = vmatpush1.msra.mxu0 0.0
    %98 = vmatprep.subr.mxu0 0.0
    %99 = vmatpush1.msra.mxu0 0.0
    %100 = vmatprep.subr.mxu0 0.0
    %101 = vmatpush1.msra.mxu0 0.0
    %102 = vmatprep.subr.mxu0 0.0
    %103 = vmatpush1.msra.mxu0 0.0
    %104 = vmatprep.subr.mxu0 0.0
    %105 = vmatpush1.msra.mxu0 0.0
    %106 = vmatprep.subr.mxu0 0.0
    %107 = vmatpush1.msra.mxu0 0.0
    %108 = vmatprep.subr.mxu0 0.0
    %109 = vmatpush1.msra.mxu0 0.0
    %110 = vmatprep.subr.mxu0 0.0
    %111 = vmatpush1.msra.mxu0 0.0
    %112 = vmatprep.subr.mxu0 0.0
    %113 = vmatpush1.msra.mxu0 0.0
    %114 = vmatprep.subr.mxu0 0.0
    %115 = vmatpush1.msra.mxu0 0.0
    %116 = vmatprep.subr.mxu0 0.0
    %117 = vmatpush1.msra.mxu0 0.0
    %118 = vmatprep.subr.mxu0 0.0
    %119 = vmatpush1.msra.mxu0 0.0
    %120 = vmatprep.subr.mxu0 0.0
    %121 = vmatpush1.msra.mxu0 %v84
    %122 = vmatprep.subr.mxu0 0.0
    %123 = vmatpush1.msra.mxu0 %v83
    %124 = vmatprep.subr.mxu0 0.0
    %125 = vmatpush1.msra.mxu0 %v82
    %126 = vmatprep.subr.mxu0 0.0
    %127 = vmatpush1.msra.mxu0 %v81
    %128 = vmatprep.subr.mxu0 0.0
    %129 = vmatpush2.msra.mxu0 0.0
    %130 = vmatprep.subr.mxu0 0.0
    %131 = vmatpush2.msra.mxu0 0.0
    %132 = vmatprep.subr.mxu0 0.0
    %133 = vmatpush2.msra.mxu0 0.0
    %134 = vmatprep.subr.mxu0 0.0
    %135 = vmatpush2.msra.mxu0 0.0
    %136 = vmatprep.subr.mxu0 0.0
    %137 = vmatpush2.msra.mxu0 0.0
    %138 = vmatprep.subr.mxu0 0.0
    %139 = vmatpush2.msra.mxu0 0.0
    %140 = vmatprep.subr.mxu0 0.0
    %141 = vmatpush2.msra.mxu0 0.0
    %142 = vmatprep.subr.mxu0 0.0
    %143 = vmatpush2.msra.mxu0 0.0
    %144 = vmatprep.subr.mxu0 0.0
    %145 = vmatpush2.msra.mxu0 0.0
    %146 = vmatprep.subr.mxu0 0.0
    %147 = vmatpush2.msra.mxu0 0.0
    %148 = vmatprep.subr.mxu0 0.0
    %149 = vmatpush2.msra.mxu0 0.0
    %150 = vmatprep.subr.mxu0 0.0
    %151 = vmatpush2.msra.mxu0 0.0
    %152 = vmatprep.subr.mxu0 0.0
    %153 = vmatpush2.msra.mxu0 0.0
    %154 = vmatprep.subr.mxu0 0.0
    %155 = vmatpush2.msra.mxu0 0.0
    %156 = vmatprep.subr.mxu0 0.0
    %157 = vmatpush2.msra.mxu0 0.0
    %158 = vmatprep.subr.mxu0 0.0
    %159 = vmatpush2.msra.mxu0 0.0
    %160 = vmatprep.mubr.f32.mxu0 0.0
    %161 = vmatmul.mubr.f32.gmra.mxu0 %v94
    %v162 = vpop.f32.mrf.mxu0
    %v163 = vadd.f32 %v90, %v162
    %v164 = vpop.f32.mrf.mxu0
    %165 = vdwg.mxu0
    %v166 = vmax.f32 %v163, 0.0
    %v167 = vld [vmem:[#allocation7] sm:$0xff]
    %v168 = vld [vmem:[#allocation7 + $0x8] sm:$0xff]
    %v169 = vld [vmem:[#allocation7 + $0x10] sm:$0xff]
    %v170 = vld [vmem:[#allocation7 + $0x18] sm:$0xff]
    %v171 = vld [vmem:[#allocation7 + $0x20] sm:$0xff]
    %v172 = vld [vmem:[#allocation7 + $0x28] sm:$0xff]
    %v173 = vld [vmem:[#allocation7 + $0x30] sm:$0xff]
    %v174 = vld [vmem:[#allocation7 + $0x38] sm:$0xff]
    %v175 = vld [vmem:[#allocation7 + $0x40] sm:$0xff]
    %v176 = vld [vmem:[#allocation7 + $0x48] sm:$0xff]
    %v177 = vld [vmem:[#allocation7 + $0x50] sm:$0xff]
    %v178 = vld [vmem:[#allocation7 + $0x58] sm:$0xff]
    %v179 = vld [vmem:[#allocation7 + $0x60] sm:$0xff]
    %v180 = vld [vmem:[#allocation7 + $0x68] sm:$0xff]
    %v181 = vld [vmem:[#allocation7 + $0x70] sm:$0xff]
    %v182 = vld [vmem:[#allocation7 + $0x78] sm:$0xff]
    %v183 = vld [vmem:[%s4] sm:$0x1]
    %v185 = vlaneseq
    %v186 = vshrl.u32 %v185, 7
    %v187 = vsub.s32 0, %v186
    %v188 = vrot.slane %v183, %v187
    %190 = vmatprep.subr.mxu0 0.0
    %191 = vmatpush1.msra.mxu0 %v182
    %192 = vmatprep.subr.mxu0 0.0
    %193 = vmatpush1.msra.mxu0 %v181
    %194 = vmatprep.subr.mxu0 0.0
    %195 = vmatpush1.msra.mxu0 %v180
    %196 = vmatprep.subr.mxu0 0.0
    %197 = vmatpush1.msra.mxu0 %v179
    %198 = vmatprep.subr.mxu0 0.0
    %199 = vmatpush1.msra.mxu0 %v178
    %200 = vmatprep.subr.mxu0 0.0
    %201 = vmatpush1.msra.mxu0 %v177
    %202 = vmatprep.subr.mxu0 0.0
    %203 = vmatpush1.msra.mxu0 %v176
    %204 = vmatprep.subr.mxu0 0.0
    %205 = vmatpush1.msra.mxu0 %v175
    %206 = vmatprep.subr.mxu0 0.0
    %207 = vmatpush1.msra.mxu0 %v174
    %208 = vmatprep.subr.mxu0 0.0
    %209 = vmatpush1.msra.mxu0 %v173
    %210 = vmatprep.subr.mxu0 0.0
    %211 = vmatpush1.msra.mxu0 %v172
    %212 = vmatprep.subr.mxu0 0.0
    %213 = vmatpush1.msra.mxu0 %v171
    %214 = vmatprep.subr.mxu0 0.0
    %215 = vmatpush1.msra.mxu0 %v170
    %216 = vmatprep.subr.mxu0 0.0
    %217 = vmatpush1.msra.mxu0 %v169
    %218 = vmatprep.subr.mxu0 0.0
    %219 = vmatpush1.msra.mxu0 %v168
    %220 = vmatprep.subr.mxu0 0.0
    %221 = vmatpush1.msra.mxu0 %v167
    %222 = vmatprep.subr.mxu0 0.0
    %223 = vmatpush2.msra.mxu0 0.0
    %224 = vmatprep.subr.mxu0 0.0
    %225 = vmatpush2.msra.mxu0 0.0
    %226 = vmatprep.subr.mxu0 0.0
    %227 = vmatpush2.msra.mxu0 0.0
    %228 = vmatprep.subr.mxu0 0.0
    %229 = vmatpush2.msra.mxu0 0.0
    %230 = vmatprep.subr.mxu0 0.0
    %231 = vmatpush2.msra.mxu0 0.0
    %232 = vmatprep.subr.mxu0 0.0
    %233 = vmatpush2.msra.mxu0 0.0
    %234 = vmatprep.subr.mxu0 0.0
    %235 = vmatpush2.msra.mxu0 0.0
    %236 = vmatprep.subr.mxu0 0.0
    %237 = vmatpush2.msra.mxu0 0.0
    %238 = vmatprep.subr.mxu0 0.0
    %239 = vmatpush2.msra.mxu0 0.0
    %240 = vmatprep.subr.mxu0 0.0
    %241 = vmatpush2.msra.mxu0 0.0
    %242 = vmatprep.subr.mxu0 0.0
    %243 = vmatpush2.msra.mxu0 0.0
    %244 = vmatprep.subr.mxu0 0.0
    %245 = vmatpush2.msra.mxu0 0.0
    %246 = vmatprep.subr.mxu0 0.0
    %247 = vmatpush2.msra.mxu0 0.0
    %248 = vmatprep.subr.mxu0 0.0
    %249 = vmatpush2.msra.mxu0 0.0
    %250 = vmatprep.subr.mxu0 0.0
    %251 = vmatpush2.msra.mxu0 0.0
    %252 = vmatprep.subr.mxu0 0.0
    %253 = vmatpush2.msra.mxu0 0.0
    %254 = vmatprep.mubr.f32.mxu0 0.0
    %255 = vmatmul.mubr.f32.gmra.mxu0 %v166
    %v256 = vpop.f32.mrf.mxu0
    %v257 = vadd.f32 %v188, %v256
    %v258 = vpop.f32.mrf.mxu0
    %259 = vdwg.mxu0
    %v260 = vmax.f32 %v257, 0.0
    %v261 = vld [vmem:[#allocation8] sm:$0xff]
    %v262 = vld [vmem:[#allocation8 + $0x8] sm:$0xff]
    %v263 = vld [vmem:[#allocation8 + $0x10] sm:$0xff]
    %v264 = vld [vmem:[#allocation8 + $0x18] sm:$0xff]
    %v265 = vld [vmem:[#allocation8 + $0x20] sm:$0xff]
    %v266 = vld [vmem:[#allocation8 + $0x28] sm:$0xff]
    %v267 = vld [vmem:[#allocation8 + $0x30] sm:$0xff]
    %v268 = vld [vmem:[#allocation8 + $0x38] sm:$0xff]
    %v269 = vld [vmem:[#allocation8 + $0x40] sm:$0xff]
    %v270 = vld [vmem:[#allocation8 + $0x48] sm:$0xff]
    %v271 = vld [vmem:[#allocation8 + $0x50] sm:$0xff]
    %v272 = vld [vmem:[#allocation8 + $0x58] sm:$0xff]
    %v273 = vld [vmem:[#allocation8 + $0x60] sm:$0xff]
    %v274 = vld [vmem:[#allocation8 + $0x68] sm:$0xff]
    %v275 = vld [vmem:[#allocation8 + $0x70] sm:$0xff]
    %v276 = vld [vmem:[#allocation8 + $0x78] sm:$0xff]
    %v277 = vld [vmem:[%s6] sm:$0x1]
    %v279 = vlaneseq
    %v280 = vshrl.u32 %v279, 7
    %v281 = vsub.s32 0, %v280
    %v282 = vrot.slane %v277, %v281
    %284 = vmatprep.subr.mxu0 0.0
    %285 = vmatpush1.msra.mxu0 %v276
    %286 = vmatprep.subr.mxu0 0.0
    %287 = vmatpush1.msra.mxu0 %v275
    %288 = vmatprep.subr.mxu0 0.0
    %289 = vmatpush1.msra.mxu0 %v274
    %290 = vmatprep.subr.mxu0 0.0
    %291 = vmatpush1.msra.mxu0 %v273
    %292 = vmatprep.subr.mxu0 0.0
    %293 = vmatpush1.msra.mxu0 %v272
    %294 = vmatprep.subr.mxu0 0.0
    %295 = vmatpush1.msra.mxu0 %v271
    %296 = vmatprep.subr.mxu0 0.0
    %297 = vmatpush1.msra.mxu0 %v270
    %298 = vmatprep.subr.mxu0 0.0
    %299 = vmatpush1.msra.mxu0 %v269
    %300 = vmatprep.subr.mxu0 0.0
    %301 = vmatpush1.msra.mxu0 %v268
    %302 = vmatprep.subr.mxu0 0.0
    %303 = vmatpush1.msra.mxu0 %v267
    %304 = vmatprep.subr.mxu0 0.0
    %305 = vmatpush1.msra.mxu0 %v266
    %306 = vmatprep.subr.mxu0 0.0
    %307 = vmatpush1.msra.mxu0 %v265
    %308 = vmatprep.subr.mxu0 0.0
    %309 = vmatpush1.msra.mxu0 %v264
    %310 = vmatprep.subr.mxu0 0.0
    %311 = vmatpush1.msra.mxu0 %v263
    %312 = vmatprep.subr.mxu0 0.0
    %313 = vmatpush1.msra.mxu0 %v262
    %314 = vmatprep.subr.mxu0 0.0
    %315 = vmatpush1.msra.mxu0 %v261
    %316 = vmatprep.subr.mxu0 0.0
    %317 = vmatpush2.msra.mxu0 0.0
    %318 = vmatprep.subr.mxu0 0.0
    %319 = vmatpush2.msra.mxu0 0.0
    %320 = vmatprep.subr.mxu0 0.0
    %321 = vmatpush2.msra.mxu0 0.0
    %322 = vmatprep.subr.mxu0 0.0
    %323 = vmatpush2.msra.mxu0 0.0
    %324 = vmatprep.subr.mxu0 0.0
    %325 = vmatpush2.msra.mxu0 0.0
    %326 = vmatprep.subr.mxu0 0.0
    %327 = vmatpush2.msra.mxu0 0.0
    %328 = vmatprep.subr.mxu0 0.0
    %329 = vmatpush2.msra.mxu0 0.0
    %330 = vmatprep.subr.mxu0 0.0
    %331 = vmatpush2.msra.mxu0 0.0
    %332 = vmatprep.subr.mxu0 0.0
    %333 = vmatpush2.msra.mxu0 0.0
    %334 = vmatprep.subr.mxu0 0.0
    %335 = vmatpush2.msra.mxu0 0.0
    %336 = vmatprep.subr.mxu0 0.0
    %337 = vmatpush2.msra.mxu0 0.0
    %338 = vmatprep.subr.mxu0 0.0
    %339 = vmatpush2.msra.mxu0 0.0
    %340 = vmatprep.subr.mxu0 0.0
    %341 = vmatpush2.msra.mxu0 0.0
    %342 = vmatprep.subr.mxu0 0.0
    %343 = vmatpush2.msra.mxu0 0.0
    %344 = vmatprep.subr.mxu0 0.0
    %345 = vmatpush2.msra.mxu0 0.0
    %346 = vmatprep.subr.mxu0 0.0
    %347 = vmatpush2.msra.mxu0 0.0
    %348 = vmatprep.mubr.f32.mxu0 0.0
    %349 = vmatmul.mubr.f32.gmra.mxu0 %v260
    %v350 = vpop.f32.mrf.mxu0
    %v351 = vadd.f32 %v282, %v350
    %v352 = vpop.f32.mrf.mxu0
    %353 = vdwg.mxu0
    %354 = vmax.xlane.f32.xlu0 %v351
    %v355 = vpop.xlane.xlu0 %354
    %v356 = vsub.f32 %v351, %v355
    %v357 = vmul.f32 %v356, 1.442695
    %v358 = vpow.pop %v357
    %359 = vadd.xlane.f32.xlu0 %v358
    %v360 = vpop.xlane.xlu0 %359
    %v361 = vlog2.pop %v360
    %v362 = vmul.f32 %v361, 0.6931472
    %v363 = vadd.f32 %v362, %v355
    %v364 = vsub.f32 %v351, %v363
    %365 = vst [vmem:[#allocation10] sm:$0xff] %v364
    // Predicated region
    $region46: #{_forward_impl.1} parent=1 // pred_check
      _
    $region47: #{_forward_impl.1} parent=1 // pred_check_branch
      %367 = sbr.rel (0) target = $region49
    $region48: #{_forward_impl.1} parent=1 // pred_region
      %s369 = ssub.s32 128, 128
      %370 = vsyncadd [#allocation4], %s369
      %s372 = sshll.u32 [#allocation10], 4
      %s373 = int_to_ptr.vmem [resolvable:$true] %s372
      %375 = dma.vmem_to_hbm [thread:$0]  %s373, 128, %s7, [#allocation4]
    $region49: #{_forward_impl.1} parent=1 // pred_fallthru
      _
    // Predicated region
    $region50: #{_forward_impl.1} parent=1 // pred_check
      _
    $region51: #{_forward_impl.1} parent=1 // pred_check_branch
      %377 = sbr.rel (0) target = $region53
    $region52: #{_forward_impl.1} parent=1 // pred_region
      %378 = dma.done [#allocation4], 128
    $region53: #{_forward_impl.1} parent=1 // pred_fallthru
      _
    %379 = vsyncpa [#allocation3], 1
    %380 = vsyncpa [#allocation6], 1
    %381 = vsyncpa [#allocation9], 1
    %382 = vsyncpa [#allocation4], 1

</llo_original>
